<compile_context>
chip_gen: v7x
topology: tpu7x:2x2x1
jax: 0.10.0
libtpu: 0.0.40
codegen_flags: <defaults>
</compile_context>

<pallas_src>
import functools

import jax
import jax.numpy as jnp
from jax.experimental import pallas as pl
from jax.experimental.pallas import tpu as pltpu

# Quantiser hyper-parameters for a pinned-offset signed 8-bit range.
ZERO = -128.0
N_LEVELS = 256.0
STEP = 1.0
_QMIN = ZERO
_QMAX = ZERO + (N_LEVELS - 1.0) * STEP   # 127.0


def _round_up(x: int, m: int) -> int:
    return ((x + m - 1) // m) * m


# ----------------------------------------------------------------------------
# Stage 1: one-shot (prepare-time) weight fake-quantisation -> int8, (K, N).
# ----------------------------------------------------------------------------
def _quantize_weight_kernel(wt_ref, inv_s_ref, q_ref):
    """q = clip(round(w_t * inv_scale), -128, 127) stored as int8.

    wt_ref    : (tk, tn)  f32 transposed-weight tile (in_features x out_features)
    inv_s_ref : (1, tn)   f32 per-output-channel 1/scale (lane-dense row)
    q_ref     : (tk, tn)  int8 integer-grid weights
    """
    q = jnp.clip(jnp.round(wt_ref[...] * inv_s_ref[...]), _QMIN, _QMAX)
    q_ref[...] = q.astype(q_ref.dtype)


def _quantize_weight_t(w_t, inv_scale_row, tk, tn):
    Kp, Np = w_t.shape
    grid = (Kp // tk, Np // tn)
    return pl.pallas_call(
        _quantize_weight_kernel,
        out_shape=jax.ShapeDtypeStruct((Kp, Np), jnp.int8),
        grid_spec=pltpu.PrefetchScalarGridSpec(
            num_scalar_prefetch=0,
            grid=grid,
            in_specs=[
                pl.BlockSpec((tk, tn), lambda k, n: (k, n)),   # transposed weight
                pl.BlockSpec((1, tn), lambda k, n: (0, n)),    # 1/scale row
            ],
            out_specs=pl.BlockSpec((tk, tn), lambda k, n: (k, n)),
        ),
        compiler_params=pltpu.CompilerParams(
            dimension_semantics=("parallel", "parallel")),
    )(w_t, inv_scale_row)


def prepare_qlinear(weight, scale, bias, *, tn=512, tk=1024):
    """One-time weight quantisation + layout prep (hoisted out of forward).

    weight : (N, K) f32    scale : (N, 1) f32    bias : (N,) or (1, N)
    Returns (qw_t, scale_row, bias_row, meta) where
      qw_t      : (Kp, Np) int8 integer-grid weight, transposed & padded
      scale_row : (1, Np)  f32 per-output-channel scale (lane-dense)
      bias_row  : (1, Np)  f32 bias (lane-dense)
      meta      : dict(n, k, tn, tk) static metadata for the forward call.
    """
    N, K = weight.shape
    assert scale.shape == (N, 1)

    tn = min(tn, _round_up(N, 128))
    tk = min(tk, _round_up(K, 128))
    Np, Kp = _round_up(N, tn), _round_up(K, tk)

    scale = scale.astype(jnp.float32)
    # Guard against scale == 0 in the quantiser; the epilogue multiplies by
    # the original scale so those channels come out as `bias`.
    safe_scale = jnp.where(scale == 0.0, 1.0, scale)
    inv_row = (1.0 / safe_scale).reshape(1, N)
    scale_row = scale.reshape(1, N)
    bias_row = jnp.asarray(bias).reshape(1, N).astype(jnp.float32)

    w_t = weight.astype(jnp.float32).T                         # (K, N)
    if (Kp, Np) != (K, N):
        w_t = jnp.pad(w_t, ((0, Kp - K), (0, Np - N)))
        inv_row = jnp.pad(inv_row, ((0, 0), (0, Np - N)), constant_values=1.0)
        scale_row = jnp.pad(scale_row, ((0, 0), (0, Np - N)))
        bias_row = jnp.pad(bias_row, ((0, 0), (0, Np - N)))

    qw_t = _quantize_weight_t(w_t, inv_row, tk, tn)
    meta = dict(n=N, k=K, tn=tn, tk=tk)
    return qw_t, scale_row, bias_row, meta


# ----------------------------------------------------------------------------
# Stage 2: tiled matmul with scale + bias epilogue.
# ----------------------------------------------------------------------------
def _qmatmul_kernel(x_ref, q_ref, s_ref, b_ref, o_ref, acc_ref):
    """acc += x @ q (standard (tm,tk)x(tk,tn) contraction); the per-channel
    scale and bias are applied once in the epilogue.

    x_ref   : (tm, tk)  activation tile, compute dtype (bf16 by default)
    q_ref   : (tk, tn)  int8 integer-grid weight tile (K, N layout)
    s_ref   : (1, tn)   per-output-channel scale (lane-dense, f32)
    b_ref   : (1, tn)   bias (lane-dense, f32)
    o_ref   : (tm, tn)  output tile
    acc_ref : (tm, tn)  f32 accumulator scratch (persists across the K axis)
    """
    k = pl.program_id(2)

    @pl.when(k == 0)
    def _():
        acc_ref[...] = jnp.zeros_like(acc_ref)

    # int8 -> compute-dtype cast on the weight tile only (VPU work hidden
    # under the MXU); activations arrive already in the compute dtype.
    w = q_ref[...].astype(x_ref.dtype)
    acc_ref[...] += jnp.dot(x_ref[...], w, preferred_element_type=jnp.float32)

    @pl.when(k == pl.num_programs(2) - 1)
    def _():
        o_ref[...] = (acc_ref[...] * s_ref[...] + b_ref[...]).astype(o_ref.dtype)


def _matmul_vmem_bytes(tm, tn, tk, x_bytes, out_bytes):
    x_b = 2 * tm * tk * x_bytes          # double-buffered x tiles
    w_b = 2 * tk * tn * 1                # double-buffered int8 weight tiles
    sb_b = 2 * 2 * tn * 4                # scale + bias rows
    o_b = 2 * tm * tn * out_bytes        # double-buffered output tiles
    acc_b = tm * tn * 4                  # f32 accumulator scratch
    return x_b + w_b + sb_b + o_b + acc_b


@functools.partial(jax.jit,
                   static_argnames=("n_out", "compute_dtype", "tm", "tn", "tk"))
def qlinear_forward(x, qw_t, scale_row, bias_row, *, n_out,
                    compute_dtype=jnp.bfloat16, tm=256, tn=512, tk=1024):
    """y = x @ fake_quant(weight).T + bias  (quantlib _QLinear forward).

    x         : (M, K) activations
    qw_t, scale_row, bias_row, n_out/tn/tk : from prepare_qlinear (cached).
    """
    M, K = x.shape
    Kp, Np = qw_t.shape
    N = n_out
    assert Np % tn == 0 and Kp % tk == 0 and K <= Kp and N <= Np
    out_dtype = x.dtype

    # Clamp the M tile to the (padded) problem size.
    tm = min(tm, _round_up(M, 8))
    Mp = _round_up(M, tm)

    # v7x megacore: if there is a single M block, make sure the N axis still
    # exposes >= 2 parallel blocks so the second TensorCore has work.
    if Mp // tm == 1:
        while (Np // tn) < 2 and tn >= 256 and tn % 256 == 0:
            tn //= 2

    # Activations travel in the compute dtype (no f32 upcast); pad only when
    # the shape is not already tile-aligned.
    xp = x.astype(compute_dtype)
    if (Mp, Kp) != (M, K):
        xp = jnp.pad(xp, ((0, Mp - M), (0, Kp - K)))

    grid = (Mp // tm, Np // tn, Kp // tk)
    vmem_est = _matmul_vmem_bytes(tm, tn, tk,
                                  jnp.dtype(compute_dtype).itemsize,
                                  jnp.dtype(out_dtype).itemsize)
    vmem_limit = int(min(64 << 20, max(8 << 20, 2 * vmem_est)))

    out = pl.pallas_call(
        _qmatmul_kernel,
        out_shape=jax.ShapeDtypeStruct((Mp, Np), out_dtype),
        grid_spec=pltpu.PrefetchScalarGridSpec(
            num_scalar_prefetch=0,
            grid=grid,
            in_specs=[
                pl.BlockSpec((tm, tk), lambda i, j, k: (i, k)),   # x
                pl.BlockSpec((tk, tn), lambda i, j, k: (k, j)),   # int8 weight (K, N)
                pl.BlockSpec((1, tn), lambda i, j, k: (0, j)),    # per-channel scale
                pl.BlockSpec((1, tn), lambda i, j, k: (0, j)),    # bias
            ],
            out_specs=pl.BlockSpec((tm, tn), lambda i, j, k: (i, j)),
            scratch_shapes=[pltpu.VMEM((tm, tn), jnp.float32)],
        ),
        compiler_params=pltpu.CompilerParams(
            dimension_semantics=("parallel", "parallel", "arbitrary"),
            vmem_limit_bytes=vmem_limit),
    )(xp, qw_t, scale_row, bias_row)

    if (Mp, Np) != (M, N):
        out = out[:M, :N]
    return out


# ----------------------------------------------------------------------------
# Init strategy + pure-JAX reference (torch module semantics).
# ----------------------------------------------------------------------------
def init_qhparams_minmax_per_channel(weight):
    """Deterministic 'minmax' init, per-output-channel (QGranularity((0,))).

    Pinned offset (zero = -128): symmetric-range scale so that
    scale*zero <= w <= scale*(zero + n_levels - 1) roughly covers the range.
    """
    absmax = jnp.max(jnp.abs(weight), axis=1, keepdims=True)   # (N, 1)
    return (jnp.maximum(absmax, 1e-8) / (-ZERO)).astype(jnp.float32)


def reference_forward(x, weight, scale, bias):
    q = jnp.clip(jnp.round(weight / scale), _QMIN, _QMAX)
    qw = q * scale
    return x @ qw.T + bias.reshape(1, -1)


if __name__ == "__main__":
    key = jax.random.PRNGKey(0)

    # (batch, in_features, out_features): one tile-aligned case and one case
    # that exercises the padding path.
    for (B, K, N) in [(8, 256, 128), (5, 200, 72)]:
        kx, kw, kb = jax.random.split(jax.random.fold_in(key, B), 3)
        x = jax.random.normal(kx, (B, K), dtype=jnp.float32)
        weight = 0.1 * jax.random.normal(kw, (N, K), dtype=jnp.float32)
        bias = 0.01 * jax.random.normal(kb, (N,), dtype=jnp.float32)
        scale = init_qhparams_minmax_per_channel(weight)       # (N, 1)

        y_ref = reference_forward(x, weight, scale, bias)

        # One-time weight quantisation (hoisted out of the forward path).
        qw_t, scale_row, bias_row, meta = prepare_qlinear(weight, scale, bias)
        jax.block_until_ready(qw_t)

        # Exact-precision path (f32 MXU operands) -> tight tolerance.
        y32 = jax.block_until_ready(qlinear_forward(
            x, qw_t, scale_row, bias_row, n_out=meta["n"],
            compute_dtype=jnp.float32, tn=meta["tn"], tk=meta["tk"]))
        assert y32.shape == (B, N)
        assert jnp.allclose(y32, y_ref, atol=1e-4, rtol=1e-4), "f32 mismatch"

        # Fast path: bf16 activations x int8->bf16 weights (integer-grid
        # weights exact in bf16; only the activation cast is lossy).
        ybf = jax.block_until_ready(qlinear_forward(
            x, qw_t, scale_row, bias_row, n_out=meta["n"],
            compute_dtype=jnp.bfloat16, tn=meta["tn"], tk=meta["tk"]))
        assert ybf.shape == (B, N)
        assert jnp.allclose(ybf, y_ref, atol=5e-2, rtol=5e-2), "bf16 mismatch"

    print("KERNEL_OK")
</pallas_src>

<mosaic_0001>
module attributes {stable_mosaic.version = 11 : i64} {
  func.func @_quantize_weight_kernel(%arg0: i32, %arg1: i32, %arg2: memref<256x128xf32, #tpu.memory_space<vmem>>, %arg3: memref<1x128xf32, #tpu.memory_space<vmem>>, %arg4: memref<256x128xi8, #tpu.memory_space<vmem>>) attributes {dimension_semantics = [#tpu.dimension_semantics<parallel>, #tpu.dimension_semantics<parallel>], iteration_bounds = array<i64: 1, 1>, scalar_prefetch = 0 : i64, scratch_operands = 0 : i64, tpu.core_type = #tpu.core_type<tc>, window_params = [{transform_indices = @transform_0, window_bounds = array<i64: 256, 128>}, {transform_indices = @transform_1, window_bounds = array<i64: 1, 128>}, {transform_indices = @transform_2, window_bounds = array<i64: 256, 128>}]} {
    %c0 = arith.constant 0 : index
    %c0_0 = arith.constant 0 : index
    %0 = vector.load %arg2[%c0, %c0_0] : memref<256x128xf32, #tpu.memory_space<vmem>>, vector<256x128xf32>
    %c0_1 = arith.constant 0 : index
    %c0_2 = arith.constant 0 : index
    %1 = vector.load %arg3[%c0_1, %c0_2] : memref<1x128xf32, #tpu.memory_space<vmem>>, vector<1x128xf32>
    %2 = vector.broadcast %1 : vector<1x128xf32> to vector<256x128xf32>
    %3 = arith.mulf %0, %2 : vector<256x128xf32>
    %4 = math.roundeven %3 : vector<256x128xf32>
    %cst = arith.constant -1.280000e+02 : f32
    %cst_3 = arith.constant 1.270000e+02 : f32
    %5 = vector.broadcast %cst : f32 to vector<256x128xf32>
    %6 = arith.maximumf %5, %4 : vector<256x128xf32>
    %7 = vector.broadcast %cst_3 : f32 to vector<256x128xf32>
    %8 = arith.minimumf %7, %6 : vector<256x128xf32>
    %9 = arith.fptosi %8 : vector<256x128xf32> to vector<256x128xi8>
    %c0_4 = arith.constant 0 : index
    %c0_5 = arith.constant 0 : index
    %10 = vector.load %arg4[%c0_4, %c0_5] : memref<256x128xi8, #tpu.memory_space<vmem>>, vector<256x128xi8>
    tpu.vector_store %arg4[%c0_4, %c0_5], %9 {strides = array<i32>} : memref<256x128xi8, #tpu.memory_space<vmem>>, vector<256x128xi8>,
    return
  }
  func.func @transform_0(%arg0: i32, %arg1: i32) -> (i32, i32) {
    %c0_i32 = arith.constant 0 : i32
    return %arg0, %arg1 : i32, i32
  }
  func.func @transform_1(%arg0: i32, %arg1: i32) -> (i32, i32) {
    %c0_i32 = arith.constant 0 : i32
    %c0_i32_0 = arith.constant 0 : i32
    return %c0_i32, %arg1 : i32, i32
  }
  func.func @transform_2(%arg0: i32, %arg1: i32) -> (i32, i32) {
    %c0_i32 = arith.constant 0 : i32
    return %arg0, %arg1 : i32, i32
  }
}

</mosaic_0001>

<llo_original>
// kernel: tpu_custom_call.1
$region0: #{tpu_custom_call.1}
  #allocation0 [shape = 'u32[]', space=smem, size = 0x4, offset = 0x4, fixed_abs, tag = 'smem constant byte address 0x4 - core index']
  #allocation1 [shape = 'u32[144,128]{1,0:T(1,128)}', space=vmem, size = 0x12000, scoped, tag = 'internal scratch']
  %s0 = inlined_call_operand.hbm [shape: f32[256,128], index: 0, kind: input, shape index: {}]
  %s1 = inlined_call_operand.vmem [shape: f32[1,128], index: 1, kind: input, shape index: {}]
  %s2 = inlined_call_operand.hbm [shape: s8[256,128], index: 2, kind: output, shape index: {}]
  %s3 = sld [smem:[#allocation0]]
  $region22: #{tpu_custom_call.1} parent=0
    _
  %s5 = ssub.s32 1, %s3
  %s6 = scalar_select 0, %s5, %s3
  $region1: #{tpu_custom_call.1} parent=0
    #allocation2 [shape = 'u8[131072]{0}', space=vmem, size = 0x20000, scoped, tag = 'input window, operand 0, single buffered']
    #allocation3 [shape = 's32[1]{0}', space=sflag, size = 0x4, scoped, tag = 'scoped memory for tpu_custom_call.1']
    #allocation4 [shape = 's32[1]{0}', space=sflag, size = 0x4, scoped, tag = 'scoped memory for tpu_custom_call.1']
    #allocation5 [shape = 'u8[32768]{0}', space=vmem, size = 0x8000, scoped, tag = 'output window, operand 0, single buffered']
    %7 = vsyncpa [#allocation3], 0
    %8 = vsyncpa [#allocation4], 0
    // Predicated region
    $region2: #{tpu_custom_call.1} parent=1 // pred_check
      _
    $region3: #{tpu_custom_call.1} parent=1 // pred_check_branch
      %10 = sbr.rel (0) target = $region5
    $region4: #{tpu_custom_call.1} parent=1 // pred_region
      %s12 = ssub.s32 4096, 4096
      %13 = vsyncadd [#allocation3], %s12
      %s14 = sshll.u32 [#allocation2], 4
      %s15 = int_to_ptr.vmem [resolvable:$true] %s14
      %20 = dma.hbm_to_vmem [thread:$0]  %s0, 4096, %s15, [#allocation3], 128, 128, 8
    $region5: #{tpu_custom_call.1} parent=1 // pred_fallthru
      _
    // Predicated region
    $region6: #{tpu_custom_call.1} parent=1 // pred_check
      _
    $region7: #{tpu_custom_call.1} parent=1 // pred_check_branch
      %22 = sbr.rel (0) target = $region9
    $region8: #{tpu_custom_call.1} parent=1 // pred_region
      _
    $region9: #{tpu_custom_call.1} parent=1 // pred_fallthru
      _
    // Predicated region
    $region10: #{tpu_custom_call.1} parent=1 // pred_check
      _
    $region11: #{tpu_custom_call.1} parent=1 // pred_check_branch
      %24 = sbr.rel (0) target = $region13
    $region12: #{tpu_custom_call.1} parent=1 // pred_region
      %25 = dma.done [#allocation3], 4096
    $region13: #{tpu_custom_call.1} parent=1 // pred_fallthru
      _
    %v26 = vld [vmem:[#allocation2] sm:$0xff]
    %v27 = vld [vmem:[#allocation2 + $0x8] sm:$0xff]
    %v28 = vld [vmem:[#allocation2 + $0x10] sm:$0xff]
    %v29 = vld [vmem:[#allocation2 + $0x18] sm:$0xff]
    %v30 = vld [vmem:[#allocation2 + $0x20] sm:$0xff]
    %v31 = vld [vmem:[#allocation2 + $0x28] sm:$0xff]
    %v32 = vld [vmem:[#allocation2 + $0x30] sm:$0xff]
    %v33 = vld [vmem:[#allocation2 + $0x38] sm:$0xff]
    %v34 = vld [vmem:[#allocation2 + $0x40] sm:$0xff]
    %v35 = vld [vmem:[#allocation2 + $0x48] sm:$0xff]
    %v36 = vld [vmem:[#allocation2 + $0x50] sm:$0xff]
    %v37 = vld [vmem:[#allocation2 + $0x58] sm:$0xff]
    %v38 = vld [vmem:[#allocation2 + $0x60] sm:$0xff]
    %v39 = vld [vmem:[#allocation2 + $0x68] sm:$0xff]
    %v40 = vld [vmem:[#allocation2 + $0x70] sm:$0xff]
    %v41 = vld [vmem:[#allocation2 + $0x78] sm:$0xff]
    %v42 = vld [vmem:[#allocation2 + $0x80] sm:$0xff]
    %v43 = vld [vmem:[#allocation2 + $0x88] sm:$0xff]
    %v44 = vld [vmem:[#allocation2 + $0x90] sm:$0xff]
    %v45 = vld [vmem:[#allocation2 + $0x98] sm:$0xff]
    %v46 = vld [vmem:[#allocation2 + $0xa0] sm:$0xff]
    %v47 = vld [vmem:[#allocation2 + $0xa8] sm:$0xff]
    %v48 = vld [vmem:[#allocation2 + $0xb0] sm:$0xff]
    %v49 = vld [vmem:[#allocation2 + $0xb8] sm:$0xff]
    %v50 = vld [vmem:[#allocation2 + $0xc0] sm:$0xff]
    %v51 = vld [vmem:[#allocation2 + $0xc8] sm:$0xff]
    %v52 = vld [vmem:[#allocation2 + $0xd0] sm:$0xff]
    %v53 = vld [vmem:[#allocation2 + $0xd8] sm:$0xff]
    %v54 = vld [vmem:[#allocation2 + $0xe0] sm:$0xff]
    %v55 = vld [vmem:[#allocation2 + $0xe8] sm:$0xff]
    %v56 = vld [vmem:[#allocation2 + $0xf0] sm:$0xff]
    %v57 = vld [vmem:[#allocation2 + $0xf8] sm:$0xff]
    %v58 = vld [vmem:[%s1] sm:$0x1]
    %v60 = vlaneseq
    %v61 = vshrl.u32 %v60, 7
    %v62 = vsub.s32 0, %v61
    %v63 = vrot.slane %v58, %v62
    %v65 = vmul.f32 %v26, %v63
    %v66 = vmul.f32 %v27, %v63
    %v67 = vmul.f32 %v28, %v63
    %v68 = vmul.f32 %v29, %v63
    %v69 = vmul.f32 %v30, %v63
    %v70 = vmul.f32 %v31, %v63
    %v71 = vmul.f32 %v32, %v63
    %v72 = vmul.f32 %v33, %v63
    %v73 = vmul.f32 %v34, %v63
    %v74 = vmul.f32 %v35, %v63
    %v75 = vmul.f32 %v36, %v63
    %v76 = vmul.f32 %v37, %v63
    %v77 = vmul.f32 %v38, %v63
    %v78 = vmul.f32 %v39, %v63
    %v79 = vmul.f32 %v40, %v63
    %v80 = vmul.f32 %v41, %v63
    %v81 = vmul.f32 %v42, %v63
    %v82 = vmul.f32 %v43, %v63
    %v83 = vmul.f32 %v44, %v63
    %v84 = vmul.f32 %v45, %v63
    %v85 = vmul.f32 %v46, %v63
    %v86 = vmul.f32 %v47, %v63
    %v87 = vmul.f32 %v48, %v63
    %v88 = vmul.f32 %v49, %v63
    %v89 = vmul.f32 %v50, %v63
    %v90 = vmul.f32 %v51, %v63
    %v91 = vmul.f32 %v52, %v63
    %v92 = vmul.f32 %v53, %v63
    %v93 = vmul.f32 %v54, %v63
    %v94 = vmul.f32 %v55, %v63
    %v95 = vmul.f32 %v56, %v63
    %v96 = vmul.f32 %v57, %v63
    %v97 = vround.ne.pseudo %v65
    %v98 = vround.ne.pseudo %v66
    %v99 = vround.ne.pseudo %v67
    %v100 = vround.ne.pseudo %v68
    %v101 = vround.ne.pseudo %v69
    %v102 = vround.ne.pseudo %v70
    %v103 = vround.ne.pseudo %v71
    %v104 = vround.ne.pseudo %v72
    %v105 = vround.ne.pseudo %v73
    %v106 = vround.ne.pseudo %v74
    %v107 = vround.ne.pseudo %v75
    %v108 = vround.ne.pseudo %v76
    %v109 = vround.ne.pseudo %v77
    %v110 = vround.ne.pseudo %v78
    %v111 = vround.ne.pseudo %v79
    %v112 = vround.ne.pseudo %v80
    %v113 = vround.ne.pseudo %v81
    %v114 = vround.ne.pseudo %v82
    %v115 = vround.ne.pseudo %v83
    %v116 = vround.ne.pseudo %v84
    %v117 = vround.ne.pseudo %v85
    %v118 = vround.ne.pseudo %v86
    %v119 = vround.ne.pseudo %v87
    %v120 = vround.ne.pseudo %v88
    %v121 = vround.ne.pseudo %v89
    %v122 = vround.ne.pseudo %v90
    %v123 = vround.ne.pseudo %v91
    %v124 = vround.ne.pseudo %v92
    %v125 = vround.ne.pseudo %v93
    %v126 = vround.ne.pseudo %v94
    %v127 = vround.ne.pseudo %v95
    %v128 = vround.ne.pseudo %v96
    %v129 = vmax.f32 %v97, -128.0
    %v130 = vmax.f32 %v98, -128.0
    %v131 = vmax.f32 %v99, -128.0
    %v132 = vmax.f32 %v100, -128.0
    %v133 = vmax.f32 %v101, -128.0
    %v134 = vmax.f32 %v102, -128.0
    %v135 = vmax.f32 %v103, -128.0
    %v136 = vmax.f32 %v104, -128.0
    %v137 = vmax.f32 %v105, -128.0
    %v138 = vmax.f32 %v106, -128.0
    %v139 = vmax.f32 %v107, -128.0
    %v140 = vmax.f32 %v108, -128.0
    %v141 = vmax.f32 %v109, -128.0
    %v142 = vmax.f32 %v110, -128.0
    %v143 = vmax.f32 %v111, -128.0
    %v144 = vmax.f32 %v112, -128.0
    %v145 = vmax.f32 %v113, -128.0
    %v146 = vmax.f32 %v114, -128.0
    %v147 = vmax.f32 %v115, -128.0
    %v148 = vmax.f32 %v116, -128.0
    %v149 = vmax.f32 %v117, -128.0
    %v150 = vmax.f32 %v118, -128.0
    %v151 = vmax.f32 %v119, -128.0
    %v152 = vmax.f32 %v120, -128.0
    %v153 = vmax.f32 %v121, -128.0
    %v154 = vmax.f32 %v122, -128.0
    %v155 = vmax.f32 %v123, -128.0
    %v156 = vmax.f32 %v124, -128.0
    %v157 = vmax.f32 %v125, -128.0
    %v158 = vmax.f32 %v126, -128.0
    %v159 = vmax.f32 %v127, -128.0
    %v160 = vmax.f32 %v128, -128.0
    %v161 = vmin.f32 %v129, 127.0
    %v162 = vmin.f32 %v130, 127.0
    %v163 = vmin.f32 %v131, 127.0
    %v164 = vmin.f32 %v132, 127.0
    %v165 = vmin.f32 %v133, 127.0
    %v166 = vmin.f32 %v134, 127.0
    %v167 = vmin.f32 %v135, 127.0
    %v168 = vmin.f32 %v136, 127.0
    %v169 = vmin.f32 %v137, 127.0
    %v170 = vmin.f32 %v138, 127.0
    %v171 = vmin.f32 %v139, 127.0
    %v172 = vmin.f32 %v140, 127.0
    %v173 = vmin.f32 %v141, 127.0
    %v174 = vmin.f32 %v142, 127.0
    %v175 = vmin.f32 %v143, 127.0
    %v176 = vmin.f32 %v144, 127.0
    %v177 = vmin.f32 %v145, 127.0
    %v178 = vmin.f32 %v146, 127.0
    %v179 = vmin.f32 %v147, 127.0
    %v180 = vmin.f32 %v148, 127.0
    %v181 = vmin.f32 %v149, 127.0
    %v182 = vmin.f32 %v150, 127.0
    %v183 = vmin.f32 %v151, 127.0
    %v184 = vmin.f32 %v152, 127.0
    %v185 = vmin.f32 %v153, 127.0
    %v186 = vmin.f32 %v154, 127.0
    %v187 = vmin.f32 %v155, 127.0
    %v188 = vmin.f32 %v156, 127.0
    %v189 = vmin.f32 %v157, 127.0
    %v190 = vmin.f32 %v158, 127.0
    %v191 = vmin.f32 %v159, 127.0
    %v192 = vmin.f32 %v160, 127.0
    %v193 = vtrunc.f32 %v161
    %v194 = vtrunc.f32 %v162
    %v195 = vtrunc.f32 %v163
    %v196 = vtrunc.f32 %v164
    %v197 = vtrunc.f32 %v165
    %v198 = vtrunc.f32 %v166
    %v199 = vtrunc.f32 %v167
    %v200 = vtrunc.f32 %v168
    %v201 = vtrunc.f32 %v169
    %v202 = vtrunc.f32 %v170
    %v203 = vtrunc.f32 %v171
    %v204 = vtrunc.f32 %v172
    %v205 = vtrunc.f32 %v173
    %v206 = vtrunc.f32 %v174
    %v207 = vtrunc.f32 %v175
    %v208 = vtrunc.f32 %v176
    %v209 = vtrunc.f32 %v177
    %v210 = vtrunc.f32 %v178
    %v211 = vtrunc.f32 %v179
    %v212 = vtrunc.f32 %v180
    %v213 = vtrunc.f32 %v181
    %v214 = vtrunc.f32 %v182
    %v215 = vtrunc.f32 %v183
    %v216 = vtrunc.f32 %v184
    %v217 = vtrunc.f32 %v185
    %v218 = vtrunc.f32 %v186
    %v219 = vtrunc.f32 %v187
    %v220 = vtrunc.f32 %v188
    %v221 = vtrunc.f32 %v189
    %v222 = vtrunc.f32 %v190
    %v223 = vtrunc.f32 %v191
    %v224 = vtrunc.f32 %v192
    %v225 = vpack.c.f32.eXmY %v193, %v194, 312
    %v229 = vpack.c.f32.eXmY %v195, %v196, 312
    %v233 = vpack.c.b8 %v229, %v225
    %v235 = vpack.c.f32.eXmY %v197, %v198, 312
    %v239 = vpack.c.f32.eXmY %v199, %v200, 312
    %v243 = vpack.c.b8 %v239, %v235
    %v245 = vpack.c.f32.eXmY %v201, %v202, 312
    %v249 = vpack.c.f32.eXmY %v203, %v204, 312
    %v253 = vpack.c.b8 %v249, %v245
    %v255 = vpack.c.f32.eXmY %v205, %v206, 312
    %v259 = vpack.c.f32.eXmY %v207, %v208, 312
    %v263 = vpack.c.b8 %v259, %v255
    %v265 = vpack.c.f32.eXmY %v209, %v210, 312
    %v269 = vpack.c.f32.eXmY %v211, %v212, 312
    %v273 = vpack.c.b8 %v269, %v265
    %v275 = vpack.c.f32.eXmY %v213, %v214, 312
    %v279 = vpack.c.f32.eXmY %v215, %v216, 312
    %v283 = vpack.c.b8 %v279, %v275
    %v285 = vpack.c.f32.eXmY %v217, %v218, 312
    %v289 = vpack.c.f32.eXmY %v219, %v220, 312
    %v293 = vpack.c.b8 %v289, %v285
    %v295 = vpack.c.f32.eXmY %v221, %v222, 312
    %v299 = vpack.c.f32.eXmY %v223, %v224, 312
    %v303 = vpack.c.b8 %v299, %v295
    %305 = vst [vmem:[#allocation5] sm:$0xff] %v233
    %306 = vst [vmem:[#allocation5 + $0x8] sm:$0xff] %v243
    %307 = vst [vmem:[#allocation5 + $0x10] sm:$0xff] %v253
    %308 = vst [vmem:[#allocation5 + $0x18] sm:$0xff] %v263
    %309 = vst [vmem:[#allocation5 + $0x20] sm:$0xff] %v273
    %310 = vst [vmem:[#allocation5 + $0x28] sm:$0xff] %v283
    %311 = vst [vmem:[#allocation5 + $0x30] sm:$0xff] %v293
    %312 = vst [vmem:[#allocation5 + $0x38] sm:$0xff] %v303
    // Predicated region
    $region14: #{tpu_custom_call.1} parent=1 // pred_check
      _
    $region15: #{tpu_custom_call.1} parent=1 // pred_check_branch
      %314 = sbr.rel (0) target = $region17
    $region16: #{tpu_custom_call.1} parent=1 // pred_region
      %s316 = ssub.s32 1024, 1024
      %317 = vsyncadd [#allocation4], %s316
      %s318 = sshll.u32 [#allocation5], 4
      %s319 = int_to_ptr.vmem [resolvable:$true] %s318
      %324 = dma.vmem_to_hbm [thread:$0]  %s319, 1024, %s2, [#allocation4], 128, 128, 8
    $region17: #{tpu_custom_call.1} parent=1 // pred_fallthru
      _
    // Predicated region
    $region18: #{tpu_custom_call.1} parent=1 // pred_check
      _
    $region19: #{tpu_custom_call.1} parent=1 // pred_check_branch
      %326 = sbr.rel (0) target = $region21
    $region20: #{tpu_custom_call.1} parent=1 // pred_region
      %327 = dma.done [#allocation4], 1024
    $region21: #{tpu_custom_call.1} parent=1 // pred_fallthru
      _
    %328 = vsyncpa [#allocation3], 1
    %329 = vsyncpa [#allocation4], 1

</llo_original>
